<compile_context>
chip_gen: v5e
topology: v5e:2x2
jax: 0.10.0
libtpu: 0.0.40
codegen_flags: <defaults>
</compile_context>

<pallas_src>
import functools
import itertools

import numpy as np
import jax
import jax.numpy as jnp
from jax.experimental import pallas as pl
from jax.experimental.pallas import tpu as pltpu


def _round_up(a, b):
    return ((a + b - 1) // b) * b


def _janossy_kernel(p_total, need_mask, single_p_tile,
                    s_ref, proj_ref, b1_ref, w2_ref, b2_ref, w3_ref, b3_ref,
                    o_ref, acc_ref):
    """Grid = (num_batch_blocks, P_pad // TP); one P-tile of permutations per step.

    s_ref    : (TP, KN)        0/1 permutation-selection tile (streamed over P)
    proj_ref : (1, KN, BH)     per-element W1-block projections, B_blk batch
                               elements packed on the lane axis (BH = B_blk*H)
    w2_ref   : (BH, BH)        block-diagonal W2
    w3_ref   : (BH, B_blk*O)   block-diagonal W3 (f32)
    acc_ref  : (1, BH) f32     running permutation-sum of the 2nd-layer output
    o_ref    : (1, 1, B_blk*O) final output rows for this batch block
    """
    p = pl.program_id(1)
    num_p = pl.num_programs(1)

    @pl.when(p == 0)
    def _():
        acc_ref[...] = jnp.zeros_like(acc_ref)

    # Layer 1: selection matmul reconstructs xperm_tile @ W1 == sum_j x[idx_j] @ W1_j
    # for all batch elements in the block at once (lane-dense BH output).
    pre = jnp.dot(s_ref[...], proj_ref[0],
                  preferred_element_type=jnp.float32) + b1_ref[...]       # (TP, BH) f32
    h1 = jnp.maximum(pre, 0.0)

    # Layer 2: block-diagonal W2 keeps packed batch columns independent while
    # keeping the MXU output lane-dense.
    h2 = jnp.dot(h1.astype(w2_ref.dtype), w2_ref[...],
                 preferred_element_type=jnp.float32) + b2_ref[...]        # (TP, BH) f32
    h2 = jnp.maximum(h2, 0.0)

    tp = s_ref.shape[0]

    def _masked(v):
        # zero rows whose global permutation index >= real P (last tile only)
        row = jax.lax.broadcasted_iota(jnp.int32, (tp, 1), 0) + p * tp
        return jnp.where(row < p_total, v, 0.0)

    if not need_mask:
        acc_ref[...] += jnp.sum(h2, axis=0, keepdims=True)
    elif single_p_tile:
        acc_ref[...] += jnp.sum(_masked(h2), axis=0, keepdims=True)
    else:
        @pl.when(p != num_p - 1)
        def _():
            acc_ref[...] += jnp.sum(h2, axis=0, keepdims=True)

        @pl.when(p == num_p - 1)
        def _():
            acc_ref[...] += jnp.sum(_masked(h2), axis=0, keepdims=True)

    # Layer 3, hoisted above the permutation sum:
    #   sum_p (h2_p @ W3 + b3) == (sum_p h2_p) @ W3 + P*b3
    @pl.when(p == num_p - 1)
    def _():
        y = jnp.dot(acc_ref[...], w3_ref[...],
                    preferred_element_type=jnp.float32) + p_total * b3_ref[...]
        o_ref[...] = y.reshape(1, 1, -1).astype(o_ref.dtype)


def janossy_pool(x, params, k=2, *, tp_max=4096, matmul_dtype=jnp.bfloat16):
    """x: (B, N, in_dim) float32.  Returns (B, out_dim) float32."""
    w1, b1, w2, b2, w3, b3 = params
    B, N, in_dim = x.shape
    H = w1.shape[1]
    O = w3.shape[1]

    # --- static ordered-k-tuple table (compile time) ---
    perm_idx = np.array(list(itertools.permutations(range(N), k)), dtype=np.int32)  # (P, k)
    P = perm_idx.shape[0]
    KN = k * N

    # --- batch packing along the lane axis so B_blk*H >= 128 ---
    B_blk = 1 if H >= 128 else -(-128 // H)          # ceil(128 / H)
    B_pad = _round_up(B, B_blk)
    num_bblk = B_pad // B_blk
    BH = B_blk * H
    BO = B_blk * O

    it = np.dtype(matmul_dtype).itemsize

    # --- P-tile size: multiple of 128, biggest that fits a ~24 MiB working set
    #     (safe against v7x's 64 MiB VMEM; v5e/v6e have 128 MiB).
    per_row = 2 * KN * it + 3 * BH * 4               # dbl-buffered S row + f32 intermediates
    tp_fit = max(128, ((24 << 20) // per_row) // 128 * 128)
    TP = min(tp_max, tp_fit, _round_up(P, 128))
    P_pad = _round_up(P, TP)
    num_p = P_pad // TP

    # --- decompose W1 into k per-position blocks; project every set element once:
    #     proj[b, j*N + n, :] = x[b, n] @ W1[j*in_dim:(j+1)*in_dim]
    prec = (jax.lax.Precision.HIGHEST if matmul_dtype == jnp.float32
            else jax.lax.Precision.DEFAULT)
    x_pad = (jnp.concatenate([x, jnp.zeros((B_pad - B, N, in_dim), x.dtype)], axis=0)
             if B_pad > B else x)
    w1_blocks = w1.reshape(k, in_dim, H)
    proj = jnp.einsum("bni,kih->bknh", x_pad, w1_blocks, precision=prec)  # (B_pad,k,N,H)
    proj = proj.reshape(B_pad, KN, H)
    # pack B_blk batch elements on the lane axis: (num_bblk, KN, B_blk*H)
    proj = (proj.reshape(num_bblk, B_blk, KN, H)
                .transpose(0, 2, 1, 3)
                .reshape(num_bblk, KN, BH)
                .astype(matmul_dtype))

    # --- static 0/1 selection matrix:  S[p, j*N + perm_idx[p, j]] = 1
    #     so S @ proj == xperm @ W1 without ever building xperm.  Padded rows = 0.
    sel_np = np.zeros((P_pad, KN), dtype=np.float32)
    rows = np.repeat(np.arange(P), k)
    cols = (np.arange(k)[None, :] * N + perm_idx).reshape(-1)
    sel_np[rows, cols] = 1.0
    sel = jnp.asarray(sel_np, dtype=matmul_dtype)

    # --- block-diagonal layer-2/3 weights keep the packed batch columns independent.
    eye = jnp.eye(B_blk, dtype=jnp.float32)
    w2_bd = jnp.kron(eye, w2.astype(jnp.float32)).astype(matmul_dtype)    # (BH, BH)
    w3_bd = jnp.kron(eye, w3.astype(jnp.float32))                         # (BH, BO) f32
    b1r = jnp.tile(b1.astype(jnp.float32), B_blk).reshape(1, BH)
    b2r = jnp.tile(b2.astype(jnp.float32), B_blk).reshape(1, BH)
    b3r = jnp.tile(b3.astype(jnp.float32), B_blk).reshape(1, BO)

    grid = (num_bblk, num_p)

    flops = int(2 * num_bblk * P_pad * (KN * BH + BH * BH) + 2 * num_bblk * BH * BO)
    bytes_accessed = int(
        num_bblk * sel.size * sel.dtype.itemsize       # S streamed once per batch block
        + proj.size * proj.dtype.itemsize
        + w2_bd.size * w2_bd.dtype.itemsize + w3_bd.size * 4
        + (b1r.size + b2r.size + b3r.size) * 4
        + num_bblk * BO * 4)

    vmem_est = (2 * TP * KN * it + 3 * TP * BH * 4     # S dbl-buffer + f32 intermediates
                + 2 * KN * BH * it                     # proj block dbl-buffer
                + BH * BH * it + BH * BO * 4           # W2_bd, W3_bd
                + (2 * BH + BO) * 4 + BH * 4 + 2 * BO * 4)
    vmem_limit = int(min(max(2 * vmem_est, 32 << 20), 48 << 20))

    kernel = functools.partial(_janossy_kernel, P, P_pad != P, num_p == 1)

    out = pl.pallas_call(
        kernel,
        out_shape=jax.ShapeDtypeStruct((num_bblk, 1, BO), jnp.float32),
        grid_spec=pltpu.PrefetchScalarGridSpec(
            num_scalar_prefetch=0,
            grid=grid,
            in_specs=[
                pl.BlockSpec((TP, KN), lambda b, p: (p, 0)),        # S tile (streamed over P)
                pl.BlockSpec((1, KN, BH), lambda b, p: (b, 0, 0)),  # packed projections
                pl.BlockSpec((1, BH), lambda b, p: (0, 0)),         # b1 (tiled)
                pl.BlockSpec((BH, BH), lambda b, p: (0, 0)),        # W2 block-diag
                pl.BlockSpec((1, BH), lambda b, p: (0, 0)),         # b2 (tiled)
                pl.BlockSpec((BH, BO), lambda b, p: (0, 0)),        # W3 block-diag
                pl.BlockSpec((1, BO), lambda b, p: (0, 0)),         # b3 (tiled)
            ],
            out_specs=pl.BlockSpec((1, 1, BO), lambda b, p: (b, 0, 0)),
            scratch_shapes=[pltpu.VMEM((1, BH), jnp.float32)],      # permutation-sum acc
        ),
        compiler_params=pltpu.CompilerParams(
            dimension_semantics=("parallel", "arbitrary"),
            vmem_limit_bytes=vmem_limit),
        cost_estimate=pl.CostEstimate(flops=flops, transcendentals=0,
                                      bytes_accessed=bytes_accessed),
    )(sel, proj, b1r, w2_bd, b2r, w3_bd, b3r)

    return out.reshape(B_pad, O)[:B]


def init_params(key, in_dim, h_dim, out_dim, k=2):
    """Deterministic PyTorch-Linear-style init; weights stored (in, out)."""
    D = in_dim * k
    dims = [(D, h_dim), (h_dim, h_dim), (h_dim, out_dim)]
    params = []
    keys = jax.random.split(key, 2 * len(dims))
    for i, (fi, fo) in enumerate(dims):
        bound = 1.0 / np.sqrt(fi)
        w = jax.random.uniform(keys[2 * i], (fi, fo), jnp.float32, -bound, bound)
        b = jax.random.uniform(keys[2 * i + 1], (fo,), jnp.float32, -bound, bound)
        params += [w, b]
    return tuple(params)


def janossy_pool_ref(x, params, k=2):
    """Plain-JAX reference (full-precision matmuls) for correctness check."""
    w1, b1, w2, b2, w3, b3 = params
    B, N, in_dim = x.shape
    perm_idx = np.array(list(itertools.permutations(range(N), k)), dtype=np.int32)
    xperm = x[:, perm_idx, :].reshape(B, perm_idx.shape[0], k * in_dim)
    hp = jax.lax.Precision.HIGHEST
    h = jax.nn.relu(jnp.matmul(xperm, w1, precision=hp) + b1)
    h = jax.nn.relu(jnp.matmul(h, w2, precision=hp) + b2)
    y = jnp.matmul(h, w3, precision=hp) + b3
    return y.sum(axis=1)


if __name__ == "__main__":
    B, N, in_dim, h_dim, out_dim, k = 2, 8, 4, 32, 16, 2

    key = jax.random.PRNGKey(0)
    kx, kp = jax.random.split(key)
    x = jax.random.normal(kx, (B, N, in_dim), jnp.float32)
    params = init_params(kp, in_dim, h_dim, out_dim, k=k)

    ref = janossy_pool_ref(x, params, k=k)

    # Exact-math path (f32 matmuls): validates the structural rewrite
    # (W1 decomposition + selection matmul + batch lane-packing + block-diagonal
    #  W2/W3 + hoisted W3 + P-tiling/masking).
    out_f32 = jax.block_until_ready(
        janossy_pool(x, params, k=k, matmul_dtype=jnp.float32))
    np.testing.assert_allclose(np.asarray(out_f32), np.asarray(ref),
                               rtol=1e-4, atol=1e-4)

    # Fast path: bf16 MXU inputs, f32 accumulation / elementwise.
    out = jax.block_until_ready(janossy_pool(x, params, k=k))
    assert out.shape == (B, out_dim)
    np.testing.assert_allclose(np.asarray(out), np.asarray(ref),
                               rtol=5e-2, atol=3e-1)

    print("KERNEL_OK")
</pallas_src>

<mosaic_0001>
module attributes {stable_mosaic.version = 11 : i64} {
  func.func @_janossy_kernel(%arg0: i32, %arg1: i32, %arg2: memref<128x16xf32, #tpu.memory_space<vmem>>, %arg3: memref<1x16x128xf32, #tpu.memory_space<vmem>>, %arg4: memref<1x128xf32, #tpu.memory_space<vmem>>, %arg5: memref<128x128xf32, #tpu.memory_space<vmem>>, %arg6: memref<1x128xf32, #tpu.memory_space<vmem>>, %arg7: memref<128x64xf32, #tpu.memory_space<vmem>>, %arg8: memref<1x64xf32, #tpu.memory_space<vmem>>, %arg9: memref<1x1x64xf32, #tpu.memory_space<vmem>>, %arg10: memref<1x128xf32, #tpu.memory_space<vmem>>) attributes {dimension_semantics = [#tpu.dimension_semantics<parallel>, #tpu.dimension_semantics<arbitrary>], iteration_bounds = array<i64: 1, 1>, scalar_prefetch = 0 : i64, scratch_operands = 1 : i64, tpu.core_type = #tpu.core_type<tc>, window_params = [{transform_indices = @transform_0, window_bounds = array<i64: 128, 16>}, {transform_indices = @transform_1, window_bounds = array<i64: 1, 16, 128>}, {pipeline_mode = #tpu.pipeline_mode<synchronous>, transform_indices = @transform_2, window_bounds = array<i64: 1, 128>}, {pipeline_mode = #tpu.pipeline_mode<synchronous>, transform_indices = @transform_3, window_bounds = array<i64: 128, 128>}, {pipeline_mode = #tpu.pipeline_mode<synchronous>, transform_indices = @transform_4, window_bounds = array<i64: 1, 128>}, {pipeline_mode = #tpu.pipeline_mode<synchronous>, transform_indices = @transform_5, window_bounds = array<i64: 128, 64>}, {pipeline_mode = #tpu.pipeline_mode<synchronous>, transform_indices = @transform_6, window_bounds = array<i64: 1, 64>}, {transform_indices = @transform_7, window_bounds = array<i64: 1, 1, 64>}]} {
    %c0_i32 = arith.constant 0 : i32
    %0 = arith.cmpi eq, %arg1, %c0_i32 : i32
    %1 = arith.extui %0 : i1 to i32
    %c0_i32_0 = arith.constant 0 : i32
    %2 = arith.cmpi ne, %1, %c0_i32_0 : i32
    scf.if %2 {
      %cst_22 = arith.constant 0.000000e+00 : f32
      %37 = vector.broadcast %cst_22 : f32 to vector<1x128xf32>
      %c0_23 = arith.constant 0 : index
      %c0_24 = arith.constant 0 : index
      %38 = vector.load %arg10[%c0_23, %c0_24] : memref<1x128xf32, #tpu.memory_space<vmem>>, vector<1x128xf32>
      tpu.vector_store %arg10[%c0_23, %c0_24], %37 {strides = array<i32>} : memref<1x128xf32, #tpu.memory_space<vmem>>, vector<1x128xf32>,
    } else {
    }
    %c0 = arith.constant 0 : index
    %c0_1 = arith.constant 0 : index
    %3 = vector.load %arg2[%c0, %c0_1] : memref<128x16xf32, #tpu.memory_space<vmem>>, vector<128x16xf32>
    %c0_2 = arith.constant 0 : index
    %c0_3 = arith.constant 0 : index
    %c0_4 = arith.constant 0 : index
    %4 = vector.load %arg3[%c0_2, %c0_3, %c0_4] : memref<1x16x128xf32, #tpu.memory_space<vmem>>, vector<1x16x128xf32>
    %5 = vector.shape_cast %4 : vector<1x16x128xf32> to vector<16x128xf32>
    %cst = arith.constant dense<0.000000e+00> : vector<128x128xf32>
    %6 = tpu.matmul %3, %5, %cst {dimension_numbers = #tpu.dot_dimension_numbers<[1], [0], [0], [1], [0, 0, 1, 1], [], []>} : vector<128x16xf32>, vector<16x128xf32>, vector<128x128xf32> -> vector<128x128xf32>
    %c0_5 = arith.constant 0 : index
    %c0_6 = arith.constant 0 : index
    %7 = vector.load %arg4[%c0_5, %c0_6] : memref<1x128xf32, #tpu.memory_space<vmem>>, vector<1x128xf32>
    %8 = vector.broadcast %7 : vector<1x128xf32> to vector<128x128xf32>
    %9 = arith.addf %6, %8 : vector<128x128xf32>
    %cst_7 = arith.constant 0.000000e+00 : f32
    %10 = vector.broadcast %cst_7 : f32 to vector<128x128xf32>
    %11 = arith.maximumf %9, %10 : vector<128x128xf32>
    %c0_8 = arith.constant 0 : index
    %c0_9 = arith.constant 0 : index
    %12 = vector.load %arg5[%c0_8, %c0_9] : memref<128x128xf32, #tpu.memory_space<vmem>>, vector<128x128xf32>
    %cst_10 = arith.constant dense<0.000000e+00> : vector<128x128xf32>
    %13 = tpu.matmul %11, %12, %cst_10 {dimension_numbers = #tpu.dot_dimension_numbers<[1], [0], [0], [1], [0, 0, 1, 1], [], []>} : vector<128x128xf32>, vector<128x128xf32>, vector<128x128xf32> -> vector<128x128xf32>
    %c0_11 = arith.constant 0 : index
    %c0_12 = arith.constant 0 : index
    %14 = vector.load %arg6[%c0_11, %c0_12] : memref<1x128xf32, #tpu.memory_space<vmem>>, vector<1x128xf32>
    %15 = vector.broadcast %14 : vector<1x128xf32> to vector<128x128xf32>
    %16 = arith.addf %13, %15 : vector<128x128xf32>
    %cst_13 = arith.constant 0.000000e+00 : f32
    %17 = vector.broadcast %cst_13 : f32 to vector<128x128xf32>
    %18 = arith.maximumf %16, %17 : vector<128x128xf32>
    %c0_14 = arith.constant 0 : index
    %c0_15 = arith.constant 0 : index
    %19 = vector.load %arg10[%c0_14, %c0_15] : memref<1x128xf32, #tpu.memory_space<vmem>>, vector<1x128xf32>
    %20 = tpu.iota {dimensions = array<i32: 0>} : vector<128x1xi32>
    %c128_i32 = arith.constant 128 : i32
    %21 = arith.muli %arg1, %c128_i32 : i32
    %22 = vector.broadcast %21 : i32 to vector<128x1xi32>
    %23 = arith.addi %20, %22 : vector<128x1xi32>
    %c56_i32 = arith.constant 56 : i32
    %24 = vector.broadcast %c56_i32 : i32 to vector<128x1xi32>
    %25 = arith.cmpi slt, %23, %24 : vector<128x1xi32>
    %cst_16 = arith.constant 0.000000e+00 : f32
    %26 = vector.shape_cast %25 : vector<128x1xi1> to vector<128x1xi1>
    %27 = vector.broadcast %26 : vector<128x1xi1> to vector<128x128xi1>
    %28 = vector.broadcast %cst_16 : f32 to vector<128x128xf32>
    %29 = arith.select %27, %18, %28 : vector<128x128xi1>, vector<128x128xf32>
    %cst_17 = arith.constant dense<0.000000e+00> : vector<128xf32>
    %30 = vector.multi_reduction <add>, %29, %cst_17 [0] : vector<128x128xf32> to vector<128xf32>
    %31 = vector.shape_cast %30 : vector<128xf32> to vector<1x128xf32>
    %32 = arith.addf %19, %31 : vector<1x128xf32>
    %c0_18 = arith.constant 0 : index
    %c0_19 = arith.constant 0 : index
    %33 = vector.load %arg10[%c0_18, %c0_19] : memref<1x128xf32, #tpu.memory_space<vmem>>, vector<1x128xf32>
    tpu.vector_store %arg10[%c0_18, %c0_19], %32 {strides = array<i32>} : memref<1x128xf32, #tpu.memory_space<vmem>>, vector<1x128xf32>,
    %c0_i32_20 = arith.constant 0 : i32
    %34 = arith.cmpi eq, %arg1, %c0_i32_20 : i32
    %35 = arith.extui %34 : i1 to i32
    %c0_i32_21 = arith.constant 0 : i32
    %36 = arith.cmpi ne, %35, %c0_i32_21 : i32
    scf.if %36 {
      %c0_22 = arith.constant 0 : index
      %c0_23 = arith.constant 0 : index
      %37 = vector.load %arg10[%c0_22, %c0_23] : memref<1x128xf32, #tpu.memory_space<vmem>>, vector<1x128xf32>
      %c0_24 = arith.constant 0 : index
      %c0_25 = arith.constant 0 : index
      %38 = vector.load %arg7[%c0_24, %c0_25] : memref<128x64xf32, #tpu.memory_space<vmem>>, vector<128x64xf32>
      %cst_26 = arith.constant dense<0.000000e+00> : vector<1x64xf32>
      %39 = tpu.matmul %37, %38, %cst_26 {dimension_numbers = #tpu.dot_dimension_numbers<[1], [0], [0], [1], [0, 0, 1, 1], [], []>} : vector<1x128xf32>, vector<128x64xf32>, vector<1x64xf32> -> vector<1x64xf32>
      %c0_27 = arith.constant 0 : index
      %c0_28 = arith.constant 0 : index
      %40 = vector.load %arg8[%c0_27, %c0_28] : memref<1x64xf32, #tpu.memory_space<vmem>>, vector<1x64xf32>
      %cst_29 = arith.constant 5.600000e+01 : f32
      %41 = vector.broadcast %cst_29 : f32 to vector<1x64xf32>
      %42 = arith.mulf %41, %40 : vector<1x64xf32>
      %43 = arith.addf %39, %42 : vector<1x64xf32>
      %44 = vector.shape_cast %43 : vector<1x64xf32> to vector<1x1x64xf32>
      %c0_30 = arith.constant 0 : index
      %c0_31 = arith.constant 0 : index
      %c0_32 = arith.constant 0 : index
      %45 = vector.load %arg9[%c0_30, %c0_31, %c0_32] : memref<1x1x64xf32, #tpu.memory_space<vmem>>, vector<1x1x64xf32>
      tpu.vector_store %arg9[%c0_30, %c0_31, %c0_32], %44 {strides = array<i32>} : memref<1x1x64xf32, #tpu.memory_space<vmem>>, vector<1x1x64xf32>,
    } else {
    }
    return
  }
  func.func @transform_0(%arg0: i32, %arg1: i32) -> (i32, i32) {
    %c0_i32 = arith.constant 0 : i32
    %c0_i32_0 = arith.constant 0 : i32
    return %arg1, %c0_i32 : i32, i32
  }
  func.func @transform_1(%arg0: i32, %arg1: i32) -> (i32, i32, i32) {
    %c0_i32 = arith.constant 0 : i32
    %c0_i32_0 = arith.constant 0 : i32
    %c0_i32_1 = arith.constant 0 : i32
    return %arg0, %c0_i32, %c0_i32_0 : i32, i32, i32
  }
  func.func @transform_2(%arg0: i32, %arg1: i32) -> (i32, i32) {
    %c0_i32 = arith.constant 0 : i32
    %c0_i32_0 = arith.constant 0 : i32
    %c0_i32_1 = arith.constant 0 : i32
    return %c0_i32, %c0_i32_0 : i32, i32
  }
  func.func @transform_3(%arg0: i32, %arg1: i32) -> (i32, i32) {
    %c0_i32 = arith.constant 0 : i32
    %c0_i32_0 = arith.constant 0 : i32
    %c0_i32_1 = arith.constant 0 : i32
    return %c0_i32, %c0_i32_0 : i32, i32
  }
  func.func @transform_4(%arg0: i32, %arg1: i32) -> (i32, i32) {
    %c0_i32 = arith.constant 0 : i32
    %c0_i32_0 = arith.constant 0 : i32
    %c0_i32_1 = arith.constant 0 : i32
    return %c0_i32, %c0_i32_0 : i32, i32
  }
  func.func @transform_5(%arg0: i32, %arg1: i32) -> (i32, i32) {
    %c0_i32 = arith.constant 0 : i32
    %c0_i32_0 = arith.constant 0 : i32
    %c0_i32_1 = arith.constant 0 : i32
    return %c0_i32, %c0_i32_0 : i32, i32
  }
  func.func @transform_6(%arg0: i32, %arg1: i32) -> (i32, i32) {
    %c0_i32 = arith.constant 0 : i32
    %c0_i32_0 = arith.constant 0 : i32
    %c0_i32_1 = arith.constant 0 : i32
    return %c0_i32, %c0_i32_0 : i32, i32
  }
  func.func @transform_7(%arg0: i32, %arg1: i32) -> (i32, i32, i32) {
    %c0_i32 = arith.constant 0 : i32
    %c0_i32_0 = arith.constant 0 : i32
    %c0_i32_1 = arith.constant 0 : i32
    return %arg0, %c0_i32, %c0_i32_0 : i32, i32, i32
  }
}

</mosaic_0001>

<llo_original>
// kernel: tpu_custom_call.1
$region0: #{tpu_custom_call.1}
  #allocation0 [shape = 'u32[]', space=smem, size = 0x4, offset = 0x4, fixed_abs, tag = 'smem constant byte address 0x4 - core index']
  #allocation1 [shape = 'u32[72,128]{1,0:T(1,128)}', space=vmem, size = 0x9000, scoped, tag = 'internal scratch']
  #allocation2 [shape = 'f32[1,128]{1,0:T(1,128)}', space=vmem, size = 0x200, scoped, tag = 'scratch operand']
  %s0 = inlined_call_operand.vmem [shape: f32[128,16], index: 0, kind: input, shape index: {}]
  %s1 = inlined_call_operand.vmem [shape: f32[1,16,128], index: 1, kind: input, shape index: {}]
  %s2 = inlined_call_operand.vmem [shape: f32[1,128], index: 2, kind: input, shape index: {}]
  %s3 = inlined_call_operand.vmem [shape: f32[128,128], index: 3, kind: input, shape index: {}]
  %s4 = inlined_call_operand.vmem [shape: f32[1,128], index: 4, kind: input, shape index: {}]
  %s5 = inlined_call_operand.vmem [shape: f32[128,64], index: 5, kind: input, shape index: {}]
  %s6 = inlined_call_operand.vmem [shape: f32[1,64], index: 6, kind: input, shape index: {}]
  %s7 = inlined_call_operand.hbm [shape: f32[1,1,64], index: 7, kind: output, shape index: {}]
  %s8 = sld [smem:[#allocation0]]
  $region46: #{tpu_custom_call.1} parent=0
    _
  %s10 = ssub.s32 1, %s8
  %s11 = scalar_select 0, %s10, %s8
  $region1: #{tpu_custom_call.1} parent=0
    #allocation3 [shape = 'u8[512]{0}', space=vmem, size = 0x400, scoped, tag = 'output window, operand 0, single buffered']
    #allocation4 [shape = 's32[1]{0}', space=sflag, size = 0x4, scoped, tag = 'scoped memory for tpu_custom_call.1']
    %12 = vsyncpa [#allocation4], 0
    // Predicated region
    $region2: #{tpu_custom_call.1} parent=1 // pred_check
      _
    $region3: #{tpu_custom_call.1} parent=1 // pred_check_branch
      %14 = sbr.rel (0) target = $region5
    $region4: #{tpu_custom_call.1} parent=1 // pred_region
      _
    $region5: #{tpu_custom_call.1} parent=1 // pred_fallthru
      _
    // Predicated region
    $region6: #{tpu_custom_call.1} parent=1 // pred_check
      _
    $region7: #{tpu_custom_call.1} parent=1 // pred_check_branch
      %16 = sbr.rel (0) target = $region9
    $region8: #{tpu_custom_call.1} parent=1 // pred_region
      _
    $region9: #{tpu_custom_call.1} parent=1 // pred_fallthru
      _
    // Predicated region
    $region10: #{tpu_custom_call.1} parent=1 // pred_check
      _
    $region11: #{tpu_custom_call.1} parent=1 // pred_check_branch
      %18 = sbr.rel (0) target = $region13
    $region12: #{tpu_custom_call.1} parent=1 // pred_region
      _
    $region13: #{tpu_custom_call.1} parent=1 // pred_fallthru
      _
    // Predicated region
    $region14: #{tpu_custom_call.1} parent=1 // pred_check
      _
    $region15: #{tpu_custom_call.1} parent=1 // pred_check_branch
      %20 = sbr.rel (0) target = $region17
    $region16: #{tpu_custom_call.1} parent=1 // pred_region
      _
    $region17: #{tpu_custom_call.1} parent=1 // pred_fallthru
      _
    // Predicated region
    $region18: #{tpu_custom_call.1} parent=1 // pred_check
      _
    $region19: #{tpu_custom_call.1} parent=1 // pred_check_branch
      %22 = sbr.rel (0) target = $region21
    $region20: #{tpu_custom_call.1} parent=1 // pred_region
      _
    $region21: #{tpu_custom_call.1} parent=1 // pred_fallthru
      _
    // Predicated region
    $region22: #{tpu_custom_call.1} parent=1 // pred_check
      _
    $region23: #{tpu_custom_call.1} parent=1 // pred_check_branch
      %24 = sbr.rel (0) target = $region25
    $region24: #{tpu_custom_call.1} parent=1 // pred_region
      _
    $region25: #{tpu_custom_call.1} parent=1 // pred_fallthru
      _
    // Predicated region
    $region26: #{tpu_custom_call.1} parent=1 // pred_check
      _
    $region27: #{tpu_custom_call.1} parent=1 // pred_check_branch
      %26 = sbr.rel (0) target = $region29
    $region28: #{tpu_custom_call.1} parent=1 // pred_region
      _
    $region29: #{tpu_custom_call.1} parent=1 // pred_fallthru
      _
    %p27 = scmp.eq.s32.totalorder 0, 0
    // Predicated region
    $region30: #{tpu_custom_call.1} parent=1 // pred_check
      %p28 = pneg %p27
    $region31: #{tpu_custom_call.1} parent=1 // pred_check_branch
      %30 = sbr.rel (%p28) target = $region33
    $region32: #{tpu_custom_call.1} parent=1 // pred_region
      %31 = vst [vmem:[#allocation2] sm:$0x1] 0.0
    $region33: #{tpu_custom_call.1} parent=1 // pred_fallthru
      _
    %v32 = vld [vmem:[%s0] sm:$0xff]
    %v33 = vld [vmem:[%s0 + $0x8] sm:$0xff]
    %v34 = vld [vmem:[%s0 + $0x10] sm:$0xff]
    %v35 = vld [vmem:[%s0 + $0x18] sm:$0xff]
    %v36 = vld [vmem:[%s0 + $0x20] sm:$0xff]
    %v37 = vld [vmem:[%s0 + $0x28] sm:$0xff]
    %v38 = vld [vmem:[%s0 + $0x30] sm:$0xff]
    %v39 = vld [vmem:[%s0 + $0x38] sm:$0xff]
    %v40 = vld [vmem:[%s0 + $0x40] sm:$0xff]
    %v41 = vld [vmem:[%s0 + $0x48] sm:$0xff]
    %v42 = vld [vmem:[%s0 + $0x50] sm:$0xff]
    %v43 = vld [vmem:[%s0 + $0x58] sm:$0xff]
    %v44 = vld [vmem:[%s0 + $0x60] sm:$0xff]
    %v45 = vld [vmem:[%s0 + $0x68] sm:$0xff]
    %v46 = vld [vmem:[%s0 + $0x70] sm:$0xff]
    %v47 = vld [vmem:[%s0 + $0x78] sm:$0xff]
    %v48 = vld [vmem:[%s1] sm:$0xff]
    %v49 = vld [vmem:[%s1 + $0x8] sm:$0xff]
    %v50 = vld [vmem:[%s2] sm:$0x1]
    %v52 = vperm.slane %v50, 0
    %vm54 = vcmask 130048
    %v56 = vsel %vm54, %v32, 0
    %v59 = vsel %vm54, %v33, 0
    %v62 = vsel %vm54, %v34, 0
    %v65 = vsel %vm54, %v35, 0
    %v68 = vsel %vm54, %v36, 0
    %v71 = vsel %vm54, %v37, 0
    %v74 = vsel %vm54, %v38, 0
    %v77 = vsel %vm54, %v39, 0
    %v80 = vsel %vm54, %v40, 0
    %v83 = vsel %vm54, %v41, 0
    %v86 = vsel %vm54, %v42, 0
    %v89 = vsel %vm54, %v43, 0
    %v92 = vsel %vm54, %v44, 0
    %v95 = vsel %vm54, %v45, 0
    %v98 = vsel %vm54, %v46, 0
    %v101 = vsel %vm54, %v47, 0
    %103 = vmatpush.msra.mxu0 0.0
    %104 = vmatpush.msra.mxu0 0.0
    %105 = vmatpush.msra.mxu0 0.0
    %106 = vmatpush.msra.mxu0 0.0
    %107 = vmatpush.msra.mxu0 0.0
    %108 = vmatpush.msra.mxu0 0.0
    %109 = vmatpush.msra.mxu0 0.0
    %110 = vmatpush.msra.mxu0 0.0
    %111 = vmatpush.msra.mxu0 0.0
    %112 = vmatpush.msra.mxu0 0.0
    %113 = vmatpush.msra.mxu0 0.0
    %114 = vmatpush.msra.mxu0 0.0
    %115 = vmatpush.msra.mxu0 0.0
    %116 = vmatpush.msra.mxu0 0.0
    %117 = vmatpush.msra.mxu0 %v49
    %118 = vmatpush.msra.mxu0 %v48
    %119 = vmatmul.f32.gmra.mxu0 %v56
    %v120 = vpop.f32.mrf.mxu0
    %v121 = vadd.f32 %v52, %v120
    %122 = vmatmul.f32.gmra.mxu0 %v59
    %v123 = vpop.f32.mrf.mxu0
    %v124 = vadd.f32 %v52, %v123
    %125 = vmatmul.f32.gmra.mxu0 %v62
    %v126 = vpop.f32.mrf.mxu0
    %v127 = vadd.f32 %v52, %v126
    %128 = vmatmul.f32.gmra.mxu0 %v65
    %v129 = vpop.f32.mrf.mxu0
    %v130 = vadd.f32 %v52, %v129
    %131 = vmatmul.f32.gmra.mxu0 %v68
    %v132 = vpop.f32.mrf.mxu0
    %v133 = vadd.f32 %v52, %v132
    %134 = vmatmul.f32.gmra.mxu0 %v71
    %v135 = vpop.f32.mrf.mxu0
    %v136 = vadd.f32 %v52, %v135
    %137 = vmatmul.f32.gmra.mxu0 %v74
    %v138 = vpop.f32.mrf.mxu0
    %v139 = vadd.f32 %v52, %v138
    %140 = vmatmul.f32.gmra.mxu0 %v77
    %v141 = vpop.f32.mrf.mxu0
    %v142 = vadd.f32 %v52, %v141
    %143 = vmatmul.f32.gmra.mxu0 %v80
    %v144 = vpop.f32.mrf.mxu0
    %v145 = vadd.f32 %v52, %v144
    %146 = vmatmul.f32.gmra.mxu0 %v83
    %v147 = vpop.f32.mrf.mxu0
    %v148 = vadd.f32 %v52, %v147
    %149 = vmatmul.f32.gmra.mxu0 %v86
    %v150 = vpop.f32.mrf.mxu0
    %v151 = vadd.f32 %v52, %v150
    %152 = vmatmul.f32.gmra.mxu0 %v89
    %v153 = vpop.f32.mrf.mxu0
    %v154 = vadd.f32 %v52, %v153
    %155 = vmatmul.f32.gmra.mxu0 %v92
    %v156 = vpop.f32.mrf.mxu0
    %v157 = vadd.f32 %v52, %v156
    %158 = vmatmul.f32.gmra.mxu0 %v95
    %v159 = vpop.f32.mrf.mxu0
    %v160 = vadd.f32 %v52, %v159
    %161 = vmatmul.f32.gmra.mxu0 %v98
    %v162 = vpop.f32.mrf.mxu0
    %v163 = vadd.f32 %v52, %v162
    %164 = vmatmul.f32.gmra.mxu0 %v101
    %v165 = vpop.f32.mrf.mxu0
    %v166 = vadd.f32 %v52, %v165
    %167 = vdwg.mxu0
    %v168 = vmax.f32 %v121, 0.0
    %v169 = vmax.f32 %v124, 0.0
    %v170 = vmax.f32 %v127, 0.0
    %v171 = vmax.f32 %v130, 0.0
    %v172 = vmax.f32 %v133, 0.0
    %v173 = vmax.f32 %v136, 0.0
    %v174 = vmax.f32 %v139, 0.0
    %v175 = vmax.f32 %v142, 0.0
    %v176 = vmax.f32 %v145, 0.0
    %v177 = vmax.f32 %v148, 0.0
    %v178 = vmax.f32 %v151, 0.0
    %v179 = vmax.f32 %v154, 0.0
    %v180 = vmax.f32 %v157, 0.0
    %v181 = vmax.f32 %v160, 0.0
    %v182 = vmax.f32 %v163, 0.0
    %v183 = vmax.f32 %v166, 0.0
    %v184 = vld [vmem:[%s3] sm:$0xff]
    %v185 = vld [vmem:[%s3 + $0x8] sm:$0xff]
    %v186 = vld [vmem:[%s3 + $0x10] sm:$0xff]
    %v187 = vld [vmem:[%s3 + $0x18] sm:$0xff]
    %v188 = vld [vmem:[%s3 + $0x20] sm:$0xff]
    %v189 = vld [vmem:[%s3 + $0x28] sm:$0xff]
    %v190 = vld [vmem:[%s3 + $0x30] sm:$0xff]
    %v191 = vld [vmem:[%s3 + $0x38] sm:$0xff]
    %v192 = vld [vmem:[%s3 + $0x40] sm:$0xff]
    %v193 = vld [vmem:[%s3 + $0x48] sm:$0xff]
    %v194 = vld [vmem:[%s3 + $0x50] sm:$0xff]
    %v195 = vld [vmem:[%s3 + $0x58] sm:$0xff]
    %v196 = vld [vmem:[%s3 + $0x60] sm:$0xff]
    %v197 = vld [vmem:[%s3 + $0x68] sm:$0xff]
    %v198 = vld [vmem:[%s3 + $0x70] sm:$0xff]
    %v199 = vld [vmem:[%s3 + $0x78] sm:$0xff]
    %v200 = vld [vmem:[%s4] sm:$0x1]
    %v202 = vperm.slane %v200, 0
    %204 = vmatpush.msra.mxu0 %v199
    %205 = vmatpush.msra.mxu0 %v198
    %206 = vmatpush.msra.mxu0 %v197
    %207 = vmatpush.msra.mxu0 %v196
    %208 = vmatpush.msra.mxu0 %v195
    %209 = vmatpush.msra.mxu0 %v194
    %210 = vmatpush.msra.mxu0 %v193
    %211 = vmatpush.msra.mxu0 %v192
    %212 = vmatpush.msra.mxu0 %v191
    %213 = vmatpush.msra.mxu0 %v190
    %214 = vmatpush.msra.mxu0 %v189
    %215 = vmatpush.msra.mxu0 %v188
    %216 = vmatpush.msra.mxu0 %v187
    %217 = vmatpush.msra.mxu0 %v186
    %218 = vmatpush.msra.mxu0 %v185
    %219 = vmatpush.msra.mxu0 %v184
    %220 = vmatmul.f32.gmra.mxu0 %v168
    %v221 = vpop.f32.mrf.mxu0
    %v222 = vadd.f32 %v202, %v221
    %223 = vmatmul.f32.gmra.mxu0 %v169
    %v224 = vpop.f32.mrf.mxu0
    %v225 = vadd.f32 %v202, %v224
    %226 = vmatmul.f32.gmra.mxu0 %v170
    %v227 = vpop.f32.mrf.mxu0
    %v228 = vadd.f32 %v202, %v227
    %229 = vmatmul.f32.gmra.mxu0 %v171
    %v230 = vpop.f32.mrf.mxu0
    %v231 = vadd.f32 %v202, %v230
    %232 = vmatmul.f32.gmra.mxu0 %v172
    %v233 = vpop.f32.mrf.mxu0
    %v234 = vadd.f32 %v202, %v233
    %235 = vmatmul.f32.gmra.mxu0 %v173
    %v236 = vpop.f32.mrf.mxu0
    %v237 = vadd.f32 %v202, %v236
    %238 = vmatmul.f32.gmra.mxu0 %v174
    %v239 = vpop.f32.mrf.mxu0
    %v240 = vadd.f32 %v202, %v239
    %241 = vmatmul.f32.gmra.mxu0 %v175
    %v242 = vpop.f32.mrf.mxu0
    %v243 = vadd.f32 %v202, %v242
    %244 = vmatmul.f32.gmra.mxu0 %v176
    %v245 = vpop.f32.mrf.mxu0
    %v246 = vadd.f32 %v202, %v245
    %247 = vmatmul.f32.gmra.mxu0 %v177
    %v248 = vpop.f32.mrf.mxu0
    %v249 = vadd.f32 %v202, %v248
    %250 = vmatmul.f32.gmra.mxu0 %v178
    %v251 = vpop.f32.mrf.mxu0
    %v252 = vadd.f32 %v202, %v251
    %253 = vmatmul.f32.gmra.mxu0 %v179
    %v254 = vpop.f32.mrf.mxu0
    %v255 = vadd.f32 %v202, %v254
    %256 = vmatmul.f32.gmra.mxu0 %v180
    %v257 = vpop.f32.mrf.mxu0
    %v258 = vadd.f32 %v202, %v257
    %259 = vmatmul.f32.gmra.mxu0 %v181
    %v260 = vpop.f32.mrf.mxu0
    %v261 = vadd.f32 %v202, %v260
    %262 = vmatmul.f32.gmra.mxu0 %v182
    %v263 = vpop.f32.mrf.mxu0
    %v264 = vadd.f32 %v202, %v263
    %265 = vmatmul.f32.gmra.mxu0 %v183
    %v266 = vpop.f32.mrf.mxu0
    %v267 = vadd.f32 %v202, %v266
    %268 = vdwg.mxu0
    %v269 = vmax.f32 %v222, 0.0
    %v270 = vmax.f32 %v225, 0.0
    %v271 = vmax.f32 %v228, 0.0
    %v272 = vmax.f32 %v231, 0.0
    %v273 = vmax.f32 %v234, 0.0
    %v274 = vmax.f32 %v237, 0.0
    %v275 = vmax.f32 %v240, 0.0
    %v276 = vmax.f32 %v243, 0.0
    %v277 = vmax.f32 %v246, 0.0
    %v278 = vmax.f32 %v249, 0.0
    %v279 = vmax.f32 %v252, 0.0
    %v280 = vmax.f32 %v255, 0.0
    %v281 = vmax.f32 %v258, 0.0
    %v282 = vmax.f32 %v261, 0.0
    %v283 = vmax.f32 %v264, 0.0
    %v284 = vmax.f32 %v267, 0.0
    %v285 = vld [vmem:[#allocation2] sm:$0x1]
    %v286 = vlaneseq
    %v287 = vshrl.u32 %v286, 7
    %v288 = vadd.s32 %v287, 8
    %v289 = vadd.s32 %v287, 16
    %v290 = vadd.s32 %v287, 24
    %v291 = vadd.s32 %v287, 32
    %v292 = vadd.s32 %v287, 40
    %v293 = vadd.s32 %v287, 48
    %v294 = vadd.s32 %v287, 56
    %v295 = vadd.s32 %v287, 64
    %v296 = vadd.s32 %v287, 72
    %v297 = vadd.s32 %v287, 80
    %v298 = vadd.s32 %v287, 88
    %v299 = vadd.s32 %v287, 96
    %v300 = vadd.s32 %v287, 104
    %v301 = vadd.s32 %v287, 112
    %v302 = vadd.s32 %v287, 120
    %s303 = smul.u32 0, 128
    %v304 = vstv %s303
    %v305 = vadd.s32 %v287, %v304
    %v306 = vadd.s32 %v288, %v304
    %v307 = vadd.s32 %v289, %v304
    %v308 = vadd.s32 %v290, %v304
    %v309 = vadd.s32 %v291, %v304
    %v310 = vadd.s32 %v292, %v304
    %v311 = vadd.s32 %v293, %v304
    %v312 = vadd.s32 %v294, %v304
    %v313 = vadd.s32 %v295, %v304
    %v314 = vadd.s32 %v296, %v304
    %v315 = vadd.s32 %v297, %v304
    %v316 = vadd.s32 %v298, %v304
    %v317 = vadd.s32 %v299, %v304
    %v318 = vadd.s32 %v300, %v304
    %v319 = vadd.s32 %v301, %v304
    %v320 = vadd.s32 %v302, %v304
    %vm321 = vcmp.lt.s32.totalorder %v305, 56
    %vm322 = vcmp.lt.s32.totalorder %v306, 56
    %vm323 = vcmp.lt.s32.totalorder %v307, 56
    %vm324 = vcmp.lt.s32.totalorder %v308, 56
    %vm325 = vcmp.lt.s32.totalorder %v309, 56
    %vm326 = vcmp.lt.s32.totalorder %v310, 56
    %vm327 = vcmp.lt.s32.totalorder %v311, 56
    %vm328 = vcmp.lt.s32.totalorder %v312, 56
    %vm329 = vcmp.lt.s32.totalorder %v313, 56
    %vm330 = vcmp.lt.s32.totalorder %v314, 56
    %vm331 = vcmp.lt.s32.totalorder %v315, 56
    %vm332 = vcmp.lt.s32.totalorder %v316, 56
    %vm333 = vcmp.lt.s32.totalorder %v317, 56
    %vm334 = vcmp.lt.s32.totalorder %v318, 56
    %vm335 = vcmp.lt.s32.totalorder %v319, 56
    %vm336 = vcmp.lt.s32.totalorder %v320, 56
    %v337 = vsel %vm321, 1, 0
    %v338 = vsel %vm322, 1, 0
    %v339 = vsel %vm323, 1, 0
    %v340 = vsel %vm324, 1, 0
    %v341 = vsel %vm325, 1, 0
    %v342 = vsel %vm326, 1, 0
    %v343 = vsel %vm327, 1, 0
    %v344 = vsel %vm328, 1, 0
    %v345 = vsel %vm329, 1, 0
    %v346 = vsel %vm330, 1, 0
    %v347 = vsel %vm331, 1, 0
    %v348 = vsel %vm332, 1, 0
    %v349 = vsel %vm333, 1, 0
    %v350 = vsel %vm334, 1, 0
    %v351 = vsel %vm335, 1, 0
    %v352 = vsel %vm336, 1, 0
    %vm353 = vcmp.eq.s32.totalorder %v337, 1
    %vm354 = vcmp.eq.s32.totalorder %v338, 1
    %vm355 = vcmp.eq.s32.totalorder %v339, 1
    %vm356 = vcmp.eq.s32.totalorder %v340, 1
    %vm357 = vcmp.eq.s32.totalorder %v341, 1
    %vm358 = vcmp.eq.s32.totalorder %v342, 1
    %vm359 = vcmp.eq.s32.totalorder %v343, 1
    %vm360 = vcmp.eq.s32.totalorder %v344, 1
    %vm361 = vcmp.eq.s32.totalorder %v345, 1
    %vm362 = vcmp.eq.s32.totalorder %v346, 1
    %vm363 = vcmp.eq.s32.totalorder %v347, 1
    %vm364 = vcmp.eq.s32.totalorder %v348, 1
    %vm365 = vcmp.eq.s32.totalorder %v349, 1
    %vm366 = vcmp.eq.s32.totalorder %v350, 1
    %vm367 = vcmp.eq.s32.totalorder %v351, 1
    %vm368 = vcmp.eq.s32.totalorder %v352, 1
    %v369 = vsel %vm353, %v269, 0.0
    %v370 = vsel %vm354, %v270, 0.0
    %v371 = vsel %vm355, %v271, 0.0
    %v372 = vsel %vm356, %v272, 0.0
    %v373 = vsel %vm357, %v273, 0.0
    %v374 = vsel %vm358, %v274, 0.0
    %v375 = vsel %vm359, %v275, 0.0
    %v376 = vsel %vm360, %v276, 0.0
    %v377 = vsel %vm361, %v277, 0.0
    %v378 = vsel %vm362, %v278, 0.0
    %v379 = vsel %vm363, %v279, 0.0
    %v380 = vsel %vm364, %v280, 0.0
    %v381 = vsel %vm365, %v281, 0.0
    %v382 = vsel %vm366, %v282, 0.0
    %v383 = vsel %vm367, %v283, 0.0
    %v384 = vsel %vm368, %v284, 0.0
    %v385 = vadd.f32 %v369, %v370
    %v386 = vadd.f32 %v385, %v371
    %v387 = vadd.f32 %v386, %v372
    %v388 = vadd.f32 %v387, %v373
    %v389 = vadd.f32 %v388, %v374
    %v390 = vadd.f32 %v389, %v375
    %v391 = vadd.f32 %v390, %v376
    %v392 = vadd.f32 %v391, %v377
    %v393 = vadd.f32 %v392, %v378
    %v394 = vadd.f32 %v393, %v379
    %v395 = vadd.f32 %v394, %v380
    %v396 = vadd.f32 %v395, %v381
    %v397 = vadd.f32 %v396, %v382
    %v398 = vadd.f32 %v397, %v383
    %v399 = vadd.f32 %v398, %v384
    %v400 = vrot.slane %v399, 4
    %v401 = vadd.f32 %v399, %v400
    %v402 = vrot.slane %v401, 2
    %v403 = vadd.f32 %v401, %v402
    %v404 = vrot.slane %v403, 1
    %v405 = vadd.f32 %v403, %v404
    %v406 = vadd.f32 %v285, %v405
    %407 = vst [vmem:[#allocation2] sm:$0x1] %v406
    // Predicated region
    $region34: #{tpu_custom_call.1} parent=1 // pred_check
      %p408 = pneg %p27
    $region35: #{tpu_custom_call.1} parent=1 // pred_check_branch
      %410 = sbr.rel (%p408) target = $region37
    $region36: #{tpu_custom_call.1} parent=1 // pred_region
      %v411 = vld [vmem:[#allocation2] sm:$0x1]
      %v412 = vld [vmem:[%s5] sm:$0xff]
      %v413 = vld [vmem:[%s5 + $0x8] sm:$0xff]
      %v414 = vld [vmem:[%s5 + $0x10] sm:$0xff]
      %v415 = vld [vmem:[%s5 + $0x18] sm:$0xff]
      %v416 = vld [vmem:[%s5 + $0x20] sm:$0xff]
      %v417 = vld [vmem:[%s5 + $0x28] sm:$0xff]
      %v418 = vld [vmem:[%s5 + $0x30] sm:$0xff]
      %v419 = vld [vmem:[%s5 + $0x38] sm:$0xff]
      %v420 = vld [vmem:[%s5 + $0x40] sm:$0xff]
      %v421 = vld [vmem:[%s5 + $0x48] sm:$0xff]
      %v422 = vld [vmem:[%s5 + $0x50] sm:$0xff]
      %v423 = vld [vmem:[%s5 + $0x58] sm:$0xff]
      %v424 = vld [vmem:[%s5 + $0x60] sm:$0xff]
      %v425 = vld [vmem:[%s5 + $0x68] sm:$0xff]
      %v426 = vld [vmem:[%s5 + $0x70] sm:$0xff]
      %v427 = vld [vmem:[%s5 + $0x78] sm:$0xff]
      %v428 = vld [vmem:[%s6] sm:$0x1]
      %v429 = vmul.f32 %v428, 56.0
      %430 = vmatpush.msra.mxu0 %v427
      %431 = vmatpush.msra.mxu0 %v426
      %432 = vmatpush.msra.mxu0 %v425
      %433 = vmatpush.msra.mxu0 %v424
      %434 = vmatpush.msra.mxu0 %v423
      %435 = vmatpush.msra.mxu0 %v422
      %436 = vmatpush.msra.mxu0 %v421
      %437 = vmatpush.msra.mxu0 %v420
      %438 = vmatpush.msra.mxu0 %v419
      %439 = vmatpush.msra.mxu0 %v418
      %440 = vmatpush.msra.mxu0 %v417
      %441 = vmatpush.msra.mxu0 %v416
      %442 = vmatpush.msra.mxu0 %v415
      %443 = vmatpush.msra.mxu0 %v414
      %444 = vmatpush.msra.mxu0 %v413
      %445 = vmatpush.msra.mxu0 %v412
      %446 = vmatmul.f32.gmra.mxu0 %v411
      %v447 = vpop.f32.mrf.mxu0
      %v448 = vadd.f32 %v429, %v447
      %449 = vdwg.mxu0
      %vm450 = vcmask 516096
      %451 = vst.msk [vmem:[#allocation3] sm:$0x1] %vm450, %v448
    $region37: #{tpu_custom_call.1} parent=1 // pred_fallthru
      _
    // Predicated region
    $region38: #{tpu_custom_call.1} parent=1 // pred_check
      _
    $region39: #{tpu_custom_call.1} parent=1 // pred_check_branch
      %453 = sbr.rel (0) target = $region41
    $region40: #{tpu_custom_call.1} parent=1 // pred_region
      %455 = vsyncadd [#allocation4], 0
      %s457 = sshll.u32 [#allocation3], 4
      %s458 = int_to_ptr.vmem [resolvable:$true] %s457
      %s459 = sshll.u32 %s7, 4
      %s460 = int_to_ptr.hbm [resolvable:$true] %s459
      %462 = dma.vmem_to_hbm [thread:$0]  %s458, 16, %s460, [#allocation4]
    $region41: #{tpu_custom_call.1} parent=1 // pred_fallthru
      _
    // Predicated region
    $region42: #{tpu_custom_call.1} parent=1 // pred_check
      _
    $region43: #{tpu_custom_call.1} parent=1 // pred_check_branch
      %464 = sbr.rel (0) target = $region45
    $region44: #{tpu_custom_call.1} parent=1 // pred_region
      %466 = dma.done [#allocation4], 16
    $region45: #{tpu_custom_call.1} parent=1 // pred_fallthru
      _
    %467 = vsyncpa [#allocation4], 1

</llo_original>
